<compile_context>
chip_gen: v6e
topology: v6e:2x2x1
jax: 0.10.0
libtpu: 0.0.40
codegen_flags: <defaults>
</compile_context>

<pallas_src>
import functools

import jax
import jax.numpy as jnp
from jax.experimental import pallas as pl
from jax.experimental.pallas import tpu as pltpu

BN_EPS = 1e-5
MIN_CIN = 8            # pad first-layer input channels up to this (K alignment)
LANE = 128             # lane-dense Cout tile width
_BIG_TILE = 256        # single-tile bottleneck width on large-VMEM chips
WIDE_MAX_CIN = 64      # use the fused 9-tap ("wide-N") matmul when Cin <= this


# --------------------------------------------------------------------------
# Hardware queries / roll-direction probe
# --------------------------------------------------------------------------
@functools.lru_cache(maxsize=None)
def _vmem_capacity_bytes():
    try:
        return int(pltpu.get_tpu_info().vmem_capacity_bytes)
    except Exception:
        return 64 * 1024 * 1024        # conservative (v7x per-TensorCore VMEM)


def _vmem_limit_bytes():
    cap = _vmem_capacity_bytes()
    return max(32 * 1024 * 1024, min((cap * 3) // 4, 96 * 1024 * 1024))


_ROLL_SIGN = None      # +1 if pltpu.roll matches jnp.roll, else -1


def _probe_roll_sign():
    """Resolve pltpu.roll's rotation direction once with a tiny probe kernel."""
    global _ROLL_SIGN
    if _ROLL_SIGN is not None:
        return _ROLL_SIGN

    def _k(x_ref, o_ref):
        o_ref[...] = pltpu.roll(x_ref[...], 3, 0)

    x = jnp.arange(16 * 128, dtype=jnp.float32).reshape(16, 128)
    y = pl.pallas_call(_k, out_shape=jax.ShapeDtypeStruct((16, 128), jnp.float32))(x)
    if bool(jnp.allclose(y, jnp.roll(x, 3, 0))):
        _ROLL_SIGN = 1
    elif bool(jnp.allclose(y, jnp.roll(x, -3, 0))):
        _ROLL_SIGN = -1
    else:
        raise RuntimeError("unexpected pltpu.roll semantics")
    return _ROLL_SIGN


# --------------------------------------------------------------------------
# In-kernel helpers
# --------------------------------------------------------------------------
def _pos_grids(M, H, W):
    """Per-row (h, w) spatial coordinates of a flattened (N*H*W, C) layout."""
    row = jax.lax.broadcasted_iota(jnp.int32, (M, 1), 0)
    if W & (W - 1) == 0:
        w_pos = row & (W - 1)
        hq = row >> (W.bit_length() - 1)
    else:
        w_pos = row % W
        hq = row // W
    h_pos = (hq & (H - 1)) if (H & (H - 1) == 0) else (hq % H)
    return h_pos, w_pos


def _tap_mask(h_pos, w_pos, dy, dx, H, W):
    """Validity mask of conv tap (dy, dx) per output row; None == all valid."""
    conds = []
    if dy == -1:
        conds.append(h_pos >= 1)
    elif dy == 1:
        conds.append(h_pos < H - 1)
    if dx == -1:
        conds.append(w_pos >= 1)
    elif dx == 1:
        conds.append(w_pos < W - 1)
    if not conds:
        return None
    mask = conds[0]
    for c in conds[1:]:
        mask = jnp.logical_and(mask, c)
    return mask


def _conv3x3(x_bf16, w_ref, h_pos, w_pos, H, W, roll_sign):
    """3x3 'same' conv (zero padding) on a flattened channels-last slab.

    x_bf16: (M, Cin) bf16 activations, rows ordered (n, h, w).
    w_ref is either
      * (Cin, 9*C)  -- "wide-N": one MXU matmul covers all 9 taps, or
      * (9, Cin, C) -- per-tap matmuls (wide layers / Cout-tiled conv2),
    tap k = (dy+1)*3 + (dx+1).  Returns the (M, C) f32 pre-BN conv output.
    """
    M = x_bf16.shape[0]
    wide = len(w_ref.shape) == 2
    C = (w_ref.shape[-1] // 9) if wide else w_ref.shape[-1]

    if wide:
        y_all = jnp.dot(x_bf16, w_ref[...], preferred_element_type=jnp.float32)

    acc = jnp.zeros((M, C), jnp.float32)
    for k in range(9):
        dy, dx = k // 3 - 1, k % 3 - 1
        off = dy * W + dx                        # flat row offset of this tap
        if wide:
            y = y_all[:, k * C:(k + 1) * C]
        else:
            y = jnp.dot(x_bf16, w_ref[k], preferred_element_type=jnp.float32)
        # result[r] must equal X[r + off] @ W_k  ->  rotate rows by -off
        sh = (roll_sign * (-off)) % M
        if sh:
            y = pltpu.roll(y, sh, 0)
        mask = _tap_mask(h_pos, w_pos, dy, dx, H, W)
        if mask is not None:
            y = jnp.where(mask, y, 0.0)          # zero padding at image borders
        acc = acc + y
    return acc


def _bn_relu(acc, g_ref, be_ref):
    """Training-mode BatchNorm (biased var, eps=1e-5) + ReLU, all f32.

    The conv bias is omitted on purpose: the batch-mean subtraction cancels it
    exactly, so the forward output matches the PyTorch module bit-for-bit up
    to rounding.
    """
    mean = jnp.mean(acc, axis=0, keepdims=True)
    var = jnp.mean(jnp.square(acc - mean), axis=0, keepdims=True)
    scale = g_ref[...] * jax.lax.rsqrt(var + BN_EPS)
    return jnp.maximum((acc - mean) * scale + be_ref[...], 0.0)


# --------------------------------------------------------------------------
# Fused block kernel (conv+BN+ReLU, conv+BN+ReLU [, final 1x1 conv])
# --------------------------------------------------------------------------
def _make_block_kernel(n_in, has_head, H, W, roll_sign):
    def kernel(*refs):
        xs = refs[0:n_in]
        w1s = refs[n_in:2 * n_in]
        g1, be1, w2, g2, be2 = refs[2 * n_in:2 * n_in + 5]
        if has_head:
            wf, bf = refs[2 * n_in + 5], refs[2 * n_in + 6]
        o_ref = refs[-1]

        M = xs[0].shape[0]
        h_pos, w_pos = _pos_grids(M, H, W)

        # conv1: sum of per-stream convs == conv over channel-concatenated input
        acc1 = None
        for x_ref, w_ref in zip(xs, w1s):
            c = _conv3x3(x_ref[...], w_ref, h_pos, w_pos, H, W, roll_sign)
            acc1 = c if acc1 is None else acc1 + c
        y1 = _bn_relu(acc1, g1, be1)

        # conv2: single bf16 cast of the intermediate (hoisted out of the taps)
        acc2 = _conv3x3(y1.astype(jnp.bfloat16), w2, h_pos, w_pos, H, W, roll_sign)
        y2 = _bn_relu(acc2, g2, be2)

        if has_head:
            # final 1x1 conv (tiny Cout): VPU broadcast-multiply + lane reduce
            cols = [jnp.sum(y2 * wf[oc:oc + 1, :], axis=-1, keepdims=True)
                    for oc in range(wf.shape[0])]
            out = cols[0] if len(cols) == 1 else jnp.concatenate(cols, axis=-1)
            o_ref[...] = (out + bf[...]).astype(o_ref.dtype)
        else:
            o_ref[...] = y2.astype(o_ref.dtype)

    return kernel


def _cout_of(w):
    return w.shape[-1] // 9 if w.ndim == 2 else w.shape[-1]


def _run_block(xs2d, H, W, bp, head=None):
    """One fused conv block (optionally + final 1x1 head) as one pallas_call.

    xs2d: list of (M, Cin_i) bf16 input streams (decoder skip-concat is fused
          by splitting w1 along K).
    """
    roll_sign = _probe_roll_sign()
    M = xs2d[0].shape[0]
    n_in = len(xs2d)
    C1 = _cout_of(bp['w1'][0])
    C2 = _cout_of(bp['w2'])

    # Cout tile of conv2: lane-dense.  Single tile for the 256-wide bottleneck
    # on large-VMEM chips (no conv1 recompute); 128-wide tiles otherwise.
    if C2 <= LANE:
        T = C2
    elif C2 <= _BIG_TILE and _vmem_capacity_bytes() >= 100 * 1024 * 1024:
        T = C2
    else:
        T = LANE
    n_t = pl.cdiv(C2, T)

    def fixed(shape):
        return pl.BlockSpec(tuple(shape), lambda j, _r=len(shape): (0,) * _r)

    in_specs = [fixed(x.shape) for x in xs2d]
    in_specs += [fixed(w.shape) for w in bp['w1']]
    in_specs += [fixed((1, C1)), fixed((1, C1))]
    if bp['w2'].ndim == 2:                              # wide-N (never tiled)
        assert n_t == 1
        in_specs += [fixed(bp['w2'].shape)]
    else:
        in_specs += [pl.BlockSpec((9, C1, T), lambda j: (0, 0, j))]
    in_specs += [pl.BlockSpec((1, T), lambda j: (0, j)),
                 pl.BlockSpec((1, T), lambda j: (0, j))]
    args = list(xs2d) + list(bp['w1']) + [bp['g1'], bp['b1'],
                                          bp['w2'], bp['g2'], bp['b2']]

    if head is None:
        # bf16 inter-block activations: halves HBM traffic / resident VMEM.
        out_shape = jax.ShapeDtypeStruct((M, C2), jnp.bfloat16)
        out_specs = pl.BlockSpec((M, T), lambda j: (0, j))
    else:
        wf, bf = head
        assert n_t == 1, "fused 1x1 head requires a single Cout tile"
        in_specs += [fixed(wf.shape), fixed(bf.shape)]
        args += [wf, bf]
        out_shape = jax.ShapeDtypeStruct((M, wf.shape[0]), jnp.float32)
        out_specs = pl.BlockSpec((M, wf.shape[0]), lambda j: (0, 0))

    kernel = _make_block_kernel(n_in, head is not None, H, W, roll_sign)
    return pl.pallas_call(
        kernel,
        out_shape=out_shape,
        grid=(n_t,),
        in_specs=in_specs,
        out_specs=out_specs,
        compiler_params=pltpu.CompilerParams(
            dimension_semantics=("parallel",),          # Cout tiles independent
            vmem_limit_bytes=_vmem_limit_bytes()),
    )(*args)


# --------------------------------------------------------------------------
# JAX glue: pooling, bilinear resize (pure data movement, stays in XLA)
# --------------------------------------------------------------------------
def max_pool2(x):
    n, h, w, c = x.shape
    return x.reshape(n, h // 2, 2, w // 2, 2, c).max(axis=(2, 4))


def bilinear_resize(x, out_h, out_w):
    # Matches F.interpolate(mode='bilinear', align_corners=False)
    n, h, w, c = x.shape

    def coords(out_size, in_size):
        i = jnp.arange(out_size, dtype=jnp.float32)
        src = (i + 0.5) * (in_size / out_size) - 0.5
        src = jnp.maximum(src, 0.0)
        i0 = jnp.minimum(jnp.floor(src).astype(jnp.int32), in_size - 1)
        i1 = jnp.minimum(i0 + 1, in_size - 1)
        lam = src - i0.astype(jnp.float32)
        return i0, i1, lam

    y0, y1, ly = coords(out_h, h)
    x0, x1, lx = coords(out_w, w)
    lx = lx[None, None, :, None]
    ly = ly[None, :, None, None]
    r0 = x[:, y0]
    r1 = x[:, y1]
    top = r0[:, :, x0] * (1.0 - lx) + r0[:, :, x1] * lx
    bot = r1[:, :, x0] * (1.0 - lx) + r1[:, :, x1] * lx
    return top * (1.0 - ly) + bot * ly


def upsample_to(a, ref_nhwc):
    return bilinear_resize(a, ref_nhwc.shape[1], ref_nhwc.shape[2]).astype(jnp.bfloat16)


# --------------------------------------------------------------------------
# Model forward (Pallas path)
# --------------------------------------------------------------------------
def unet_forward(x_nchw, params):
    x = jnp.transpose(x_nchw, (0, 2, 3, 1)).astype(jnp.bfloat16)      # -> NHWC
    cin = x.shape[-1]
    if cin < MIN_CIN:                                                 # K alignment
        x = jnp.pad(x, ((0, 0), (0, 0), (0, 0), (0, MIN_CIN - cin)))

    def run(inputs, p, head=None):
        if not isinstance(inputs, (list, tuple)):
            inputs = [inputs]
        n, h, w, _ = inputs[0].shape
        flat = [a.reshape(n * h * w, a.shape[-1]) for a in inputs]
        out = _run_block(flat, h, w, p, head=head)
        return out.reshape(n, h, w, -1)

    e1 = run(x, params['enc1'])
    e2 = run(max_pool2(e1), params['enc2'])
    e3 = run(max_pool2(e2), params['enc3'])
    b = run(max_pool2(e3), params['bottleneck'])
    # skip-concat fused into the decoder kernels (two streams, w1 split on K)
    d3 = run([upsample_to(b, e3), e3], params['dec3'])
    d2 = run([upsample_to(d3, e2), e2], params['dec2'])
    out = run([upsample_to(d2, e1), e1], params['dec1'], head=params['final'])
    return jnp.transpose(out, (0, 3, 1, 2))                           # -> NCHW


# --------------------------------------------------------------------------
# Pure-JAX reference (same bf16 matmul operands / f32 accumulation)
# --------------------------------------------------------------------------
def _conv_ref(x, w):
    return jax.lax.conv_general_dilated(
        x, w, (1, 1), 'SAME',
        dimension_numbers=('NHWC', 'HWIO', 'NHWC'),
        preferred_element_type=jnp.float32)


def _bn_relu_ref(y, gamma, beta):
    mean = jnp.mean(y, axis=(0, 1, 2), keepdims=True)
    var = jnp.mean(jnp.square(y - mean), axis=(0, 1, 2), keepdims=True)
    return jnp.maximum((y - mean) * (gamma * jax.lax.rsqrt(var + BN_EPS)) + beta, 0.0)


def unet_reference(x_nchw, rp):
    x = jnp.transpose(x_nchw, (0, 2, 3, 1)).astype(jnp.bfloat16)

    def block(xb, p):
        y = _bn_relu_ref(_conv_ref(xb, p['w1']), p['g1'], p['b1'])
        y = _bn_relu_ref(_conv_ref(y.astype(jnp.bfloat16), p['w2']), p['g2'], p['b2'])
        return y                                                      # f32

    e1 = block(x, rp['enc1']).astype(jnp.bfloat16)
    e2 = block(max_pool2(e1), rp['enc2']).astype(jnp.bfloat16)
    e3 = block(max_pool2(e2), rp['enc3']).astype(jnp.bfloat16)
    b = block(max_pool2(e3), rp['bottleneck']).astype(jnp.bfloat16)
    d3 = block(jnp.concatenate([upsample_to(b, e3), e3], -1), rp['dec3']).astype(jnp.bfloat16)
    d2 = block(jnp.concatenate([upsample_to(d3, e2), e2], -1), rp['dec2']).astype(jnp.bfloat16)
    d1 = block(jnp.concatenate([upsample_to(d2, e1), e1], -1), rp['dec1'])
    wf, bf = rp['final']
    out = jnp.einsum('nhwc,oc->nhwo', d1, wf) + bf.reshape(1, 1, 1, -1)
    return jnp.transpose(out, (0, 3, 1, 2))


# --------------------------------------------------------------------------
# Parameters
# --------------------------------------------------------------------------
def init_params(key, in_channels=3, out_channels=1):
    """Returns (kernel_params, reference_params).

    Conv biases are omitted: with training-mode BatchNorm directly after each
    conv, the bias is exactly cancelled by the mean subtraction.
    """
    def conv_w(k, cin, cout):
        return jax.random.normal(k, (3, 3, cin, cout), jnp.float32) / jnp.sqrt(9.0 * cin)

    def bn_p(k, c):
        kg, kb = jax.random.split(k)
        gamma = 1.0 + 0.1 * jax.random.normal(kg, (1, c), jnp.float32)
        beta = 0.1 * jax.random.normal(kb, (1, c), jnp.float32)
        return gamma, beta

    def kernel_w_layout(w, cin_pad=None):
        # (3,3,Cin,Cout) -> bf16 kernel layout:
        #   Cin <= WIDE_MAX_CIN : "wide-N" (Cin, 9*Cout)  (one MXU matmul/conv)
        #   otherwise           : per-tap  (9, Cin, Cout)  (Cout lane-tileable)
        if cin_pad is not None and cin_pad > w.shape[2]:
            w = jnp.pad(w, ((0, 0), (0, 0), (0, cin_pad - w.shape[2]), (0, 0)))
        kh, kw, cin, cout = w.shape
        if cin <= WIDE_MAX_CIN:
            return jnp.transpose(w, (2, 0, 1, 3)).reshape(cin, kh * kw * cout).astype(jnp.bfloat16)
        return w.reshape(kh * kw, cin, cout).astype(jnp.bfloat16)

    def block(k, cins, cout, cin_pad_first=None):
        k1, k2, k3, k4 = jax.random.split(k, 4)
        w1_full = conv_w(k1, sum(cins), cout)
        w2_full = conv_w(k2, cout, cout)
        g1, b1 = bn_p(k3, cout)
        g2, b2 = bn_p(k4, cout)
        w1s, off = [], 0
        for i, c in enumerate(cins):                 # PyTorch cat order: [up, skip]
            piece = w1_full[:, :, off:off + c, :]
            w1s.append(kernel_w_layout(piece, cin_pad=(cin_pad_first if i == 0 else None)))
            off += c
        kp = {'w1': w1s, 'g1': g1, 'b1': b1,
              'w2': kernel_w_layout(w2_full), 'g2': g2, 'b2': b2}
        rp = {'w1': w1_full.astype(jnp.bfloat16), 'w2': w2_full.astype(jnp.bfloat16),
              'g1': g1.reshape(1, 1, 1, -1), 'b1': b1.reshape(1, 1, 1, -1),
              'g2': g2.reshape(1, 1, 1, -1), 'b2': b2.reshape(1, 1, 1, -1)}
        return kp, rp

    keys = jax.random.split(key, 8)
    kp, rp = {}, {}
    kp['enc1'], rp['enc1'] = block(keys[0], [in_channels], 32, cin_pad_first=MIN_CIN)
    kp['enc2'], rp['enc2'] = block(keys[1], [32], 64)
    kp['enc3'], rp['enc3'] = block(keys[2], [64], 128)
    kp['bottleneck'], rp['bottleneck'] = block(keys[3], [128], 256)
    kp['dec3'], rp['dec3'] = block(keys[4], [256, 128], 128)
    kp['dec2'], rp['dec2'] = block(keys[5], [128, 64], 64)
    kp['dec1'], rp['dec1'] = block(keys[6], [64, 32], 32)
    kwf, kbf = jax.random.split(keys[7])
    wf = jax.random.normal(kwf, (out_channels, 32), jnp.float32) / jnp.sqrt(32.0)
    bf = 0.01 * jax.random.normal(kbf, (1, out_channels), jnp.float32)
    kp['final'] = (wf, bf)
    rp['final'] = (wf, bf)
    return kp, rp


if __name__ == "__main__":
    key = jax.random.PRNGKey(0)
    k_param, k_input = jax.random.split(key)
    params, ref_params = init_params(k_param, in_channels=3, out_channels=1)
    x = jax.random.normal(k_input, (2, 3, 16, 16), jnp.float32)       # NCHW input

    _probe_roll_sign()                      # resolve roll direction before jit

    fwd = jax.jit(lambda inp: unet_forward(inp, params))
    out = jax.block_until_ready(fwd(x))

    assert out.shape == (2, 1, 16, 16), out.shape
    assert out.dtype == jnp.float32
    assert bool(jnp.all(jnp.isfinite(out)))

    # Numerical self-check against a pure-JAX reference that uses the same
    # bf16 matmul operands / f32 accumulation (catches roll-direction, tiling,
    # weight-layout and BN bugs; remaining diff is bf16 rounding noise).
    ref = jax.block_until_ready(jax.jit(lambda inp: unet_reference(inp, ref_params))(x))
    err = float(jnp.max(jnp.abs(out - ref)))
    scale = float(jnp.max(jnp.abs(ref)))
    assert err <= 5e-2 * (1.0 + scale), (err, scale)

    print("KERNEL_OK")
</pallas_src>

<mosaic_0001>
module attributes {stable_mosaic.version = 11 : i64} {
  func.func @_k(%arg0: memref<16x128xf32, #tpu.memory_space<vmem>>, %arg1: memref<16x128xf32, #tpu.memory_space<vmem>>) attributes {dimension_semantics = [], scalar_prefetch = 0 : i64, scratch_operands = 0 : i64, tpu.core_type = #tpu.core_type<tc>} {
    %c0 = arith.constant 0 : index
    %c0_0 = arith.constant 0 : index
    %0 = vector.load %arg0[%c0, %c0_0] : memref<16x128xf32, #tpu.memory_space<vmem>>, vector<16x128xf32>
    %c3_i32 = arith.constant 3 : i32
    %1 = tpu.dynamic_rotate %0 by %c3_i32 dim 0 : vector<16x128xf32>, i32 -> vector<16x128xf32>
    %c0_1 = arith.constant 0 : index
    %c0_2 = arith.constant 0 : index
    %2 = vector.load %arg1[%c0_1, %c0_2] : memref<16x128xf32, #tpu.memory_space<vmem>>, vector<16x128xf32>
    tpu.vector_store %arg1[%c0_1, %c0_2], %1 {strides = array<i32>} : memref<16x128xf32, #tpu.memory_space<vmem>>, vector<16x128xf32>,
    return
  }
}

</mosaic_0001>

<llo_original>
// kernel: tpu_custom_call.1
$region0: #{tpu_custom_call.1}
  #allocation0 [shape = 'u32[]', space=smem, size = 0x4, offset = 0x4, fixed_abs, tag = 'smem constant byte address 0x4 - core index']
  #allocation1 [shape = 'u32[144,128]{1,0:T(1,128)}', space=vmem, size = 0x12000, scoped, tag = 'internal scratch']
  %s0 = inlined_call_operand.hbm [shape: f32[16,128], index: 0, kind: input, shape index: {}]
  %s1 = inlined_call_operand.hbm [shape: f32[16,128], index: 1, kind: output, shape index: {}]
  %s2 = sld [smem:[#allocation0]]
  $region18: #{tpu_custom_call.1} parent=0
    _
  %s4 = ssub.s32 1, %s2
  %s5 = scalar_select 0, %s4, %s2
  $region1: #{tpu_custom_call.1} parent=0
    #allocation2 [shape = 'u8[8192]{0}', space=vmem, size = 0x2000, scoped, tag = 'input window, operand 0, single buffered']
    #allocation3 [shape = 's32[1]{0}', space=sflag, size = 0x4, scoped, tag = 'scoped memory for tpu_custom_call.1']
    #allocation4 [shape = 's32[1]{0}', space=sflag, size = 0x4, scoped, tag = 'scoped memory for tpu_custom_call.1']
    #allocation5 [shape = 'u8[8192]{0}', space=vmem, size = 0x2000, scoped, tag = 'output window, operand 0, single buffered']
    %6 = vsyncpa [#allocation3], 0
    %7 = vsyncpa [#allocation4], 0
    // Predicated region
    $region2: #{tpu_custom_call.1} parent=1 // pred_check
      _
    $region3: #{tpu_custom_call.1} parent=1 // pred_check_branch
      %9 = sbr.rel (0) target = $region5
    $region4: #{tpu_custom_call.1} parent=1 // pred_region
      %s11 = ssub.s32 256, 256
      %12 = vsyncadd [#allocation3], %s11
      %s13 = sshll.u32 [#allocation2], 4
      %s14 = int_to_ptr.vmem [resolvable:$true] %s13
      %19 = dma.hbm_to_vmem [thread:$0]  %s0, 256, %s14, [#allocation3], 128, 128, 8
    $region5: #{tpu_custom_call.1} parent=1 // pred_fallthru
      _
    // Predicated region
    $region6: #{tpu_custom_call.1} parent=1 // pred_check
      _
    $region7: #{tpu_custom_call.1} parent=1 // pred_check_branch
      %21 = sbr.rel (0) target = $region9
    $region8: #{tpu_custom_call.1} parent=1 // pred_region
      %22 = dma.done [#allocation3], 256
    $region9: #{tpu_custom_call.1} parent=1 // pred_fallthru
      _
    %v23 = vld [vmem:[#allocation2] sm:$0xff]
    %v24 = vld [vmem:[#allocation2 + $0x8] sm:$0xff]
    %v25 = vrot.slane %v23, 5
    %v26 = vrot.slane %v24, 5
    %v27 = vlaneseq
    %v28 = vshrl.u32 %v27, 7
    %vm29 = vcmp.lt.s32.totalorder %v28, 3
    %v30 = vsel %vm29, %v25, %v26
    %v31 = vsel %vm29, %v26, %v25
    %32 = vst [vmem:[#allocation5] sm:$0xff] %v31
    %33 = vst [vmem:[#allocation5 + $0x8] sm:$0xff] %v30
    // Predicated region
    $region10: #{tpu_custom_call.1} parent=1 // pred_check
      _
    $region11: #{tpu_custom_call.1} parent=1 // pred_check_branch
      %35 = sbr.rel (0) target = $region13
    $region12: #{tpu_custom_call.1} parent=1 // pred_region
      %s37 = ssub.s32 256, 256
      %38 = vsyncadd [#allocation4], %s37
      %s39 = sshll.u32 [#allocation5], 4
      %s40 = int_to_ptr.vmem [resolvable:$true] %s39
      %45 = dma.vmem_to_hbm [thread:$0]  %s40, 256, %s1, [#allocation4], 128, 128, 8
    $region13: #{tpu_custom_call.1} parent=1 // pred_fallthru
      _
    // Predicated region
    $region14: #{tpu_custom_call.1} parent=1 // pred_check
      _
    $region15: #{tpu_custom_call.1} parent=1 // pred_check_branch
      %47 = sbr.rel (0) target = $region17
    $region16: #{tpu_custom_call.1} parent=1 // pred_region
      %48 = dma.done [#allocation4], 256
    $region17: #{tpu_custom_call.1} parent=1 // pred_fallthru
      _
    %49 = vsyncpa [#allocation3], 1
    %50 = vsyncpa [#allocation4], 1

</llo_original>
